<compile_context>
chip_gen: v7x
topology: tpu7x:2x2x1
jax: 0.10.0
libtpu: 0.0.40
codegen_flags: <defaults>
</compile_context>

<pallas_src>
import jax
import jax.numpy as jnp
from jax.experimental import pallas as pl
from jax.experimental.pallas import tpu as pltpu


def _round_up(x, m):
    return (x + m - 1) // m * m


def _patch_embed_kernel(x_ref, w_ref, b_ref, o_ref):
    # x_ref: (TM, K)  bf16 patch tile
    # w_ref: (K, E)   bf16 projection weight (resident: constant block index)
    # b_ref: (1, E)   f32 bias (resident)
    # o_ref: (TM, E)  output tile (f32 or bf16)
    acc = jnp.dot(x_ref[...], w_ref[...], preferred_element_type=jnp.float32)
    o_ref[...] = (acc + b_ref[...]).astype(o_ref.dtype)


def patch_embed(x, weight, bias, patch_size, *, tm_max=1024, out_dtype=None):
    """ViT patch embedding.

    x: (B, C, H, W); weight: (E, C, P, P); bias: (E,)  ->  (B, N, E)

    out_dtype defaults to x.dtype (matches the PyTorch module).  For bf16
    models pass jnp.bfloat16 to halve the output writeback (v6e/v7x win);
    accumulation and the bias add are f32 regardless.  E should be a multiple
    of 128 (true for ViT: 768/1024) for lane-dense output stores.
    """
    B, C, H, W = x.shape
    E = weight.shape[0]
    P = patch_size
    assert H % P == 0 and W % P == 0
    assert tm_max % 128 == 0
    gh, gw = H // P, W // P
    num_patches = gh * gw
    M = B * num_patches
    K = C * P * P
    out_dtype = x.dtype if out_dtype is None else jnp.dtype(out_dtype)

    # --- glue: patchify in bf16; K ordered (C, kh, kw) to match the flattened
    # Conv2d weight.  XLA fuses the f32->bf16 convert into the transpose copy,
    # so this is one read-f32 / write-bf16 HBM pass (see fusion TODO above).
    xp = x.astype(jnp.bfloat16).reshape(B, C, gh, P, gw, P)
    patches = jnp.transpose(xp, (0, 2, 4, 1, 3, 5)).reshape(M, K)

    w_mat = weight.reshape(E, K).T.astype(jnp.bfloat16)   # (K, E), resident
    b_mat = bias.reshape(1, E).astype(jnp.float32)

    # --- row tile: multiples of 128 (MXU-friendly, esp. v5e); no M/K/E padding.
    if M >= 128:
        TM = min(tm_max, _round_up(M, 128))
        # v7x megacore: keep the single "parallel" axis >= 4 steps when we can
        # so both TensorCores stay busy.  TM stays a multiple of 128.
        while TM > 256 and pl.cdiv(M, TM) < 4:
            TM //= 2
    else:
        TM = _round_up(M, 8)          # tiny-M path (tests / very small batches)
    grid = (pl.cdiv(M, TM),)          # ragged last block is masked by Pallas

    out_size = jnp.dtype(out_dtype).itemsize
    # Double-buffered patch/output tiles; weight & bias counted twice (default
    # pipelining keeps two buffers even for constant block indices).
    # TODO(synk): pipeline_mode=pl.Buffered(1) on the resident weight/bias to
    # reclaim their second buffer on v7x's smaller (64 MiB) VMEM.
    footprint = (2 * TM * K * 2) + (2 * K * E * 2) + (2 * E * 4) \
                + (2 * TM * E * out_size)
    vmem_limit = min(max(int(footprint * 1.5), 32 << 20), 64 << 20)

    cost = pl.CostEstimate(
        flops=2 * M * K * E,
        transcendentals=0,
        bytes_accessed=M * K * 2 + K * E * 2 + E * 4 + M * E * out_size,
    )

    out = pl.pallas_call(
        _patch_embed_kernel,
        out_shape=jax.ShapeDtypeStruct((M, E), out_dtype),
        grid_spec=pltpu.PrefetchScalarGridSpec(
            num_scalar_prefetch=0,
            grid=grid,
            in_specs=[
                pl.BlockSpec((TM, K), lambda i: (i, 0)),   # patch row tile
                pl.BlockSpec((K, E), lambda i: (0, 0)),    # weight (resident)
                pl.BlockSpec((1, E), lambda i: (0, 0)),    # bias (resident)
            ],
            out_specs=pl.BlockSpec((TM, E), lambda i: (i, 0)),
        ),
        compiler_params=pltpu.CompilerParams(
            dimension_semantics=("parallel",),
            vmem_limit_bytes=vmem_limit,
        ),
        cost_estimate=cost,
    )(patches, w_mat, b_mat)

    # Leading-dim split only: layout-free, no extra HBM pass.
    return out.reshape(B, num_patches, E)


def _reference_f32(x, weight, bias, patch_size):
    # Full-precision torch-equivalent: Conv2d(stride=kernel=P) + flatten + transpose.
    out = jax.lax.conv_general_dilated(
        x, weight,
        window_strides=(patch_size, patch_size),
        padding="VALID",
        dimension_numbers=("NCHW", "OIHW", "NCHW"),
    ) + bias[None, :, None, None]
    B, E, gh, gw = out.shape
    return jnp.transpose(out.reshape(B, E, gh * gw), (0, 2, 1))


def _reference_bf16(x, weight, bias, patch_size):
    # Mirrors the kernel's dtype handling (bf16 inputs, f32 accumulate + bias).
    B, C, H, W = x.shape
    E = weight.shape[0]
    P = patch_size
    gh, gw = H // P, W // P
    xp = x.astype(jnp.bfloat16).reshape(B, C, gh, P, gw, P)
    xp = jnp.transpose(xp, (0, 2, 4, 1, 3, 5)).reshape(B * gh * gw, C * P * P)
    w = weight.reshape(E, C * P * P).T.astype(jnp.bfloat16)
    out = jnp.dot(xp, w, preferred_element_type=jnp.float32) + bias[None, :]
    return out.reshape(B, gh * gw, E).astype(x.dtype)


if __name__ == "__main__":
    # Small shapes: batch=2, in_chans=4, 16x16 image, patch=4, embed=32
    B, C, H, W = 2, 4, 16, 16
    P, E = 4, 32

    key = jax.random.PRNGKey(0)
    kx, kw, kb = jax.random.split(key, 3)
    x = jax.random.normal(kx, (B, C, H, W), dtype=jnp.float32)
    weight = jax.random.normal(kw, (E, C, P, P), dtype=jnp.float32) * 0.02
    bias = jax.random.normal(kb, (E,), dtype=jnp.float32) * 0.02

    out = jax.block_until_ready(patch_embed(x, weight, bias, P))

    N = (H // P) * (W // P)
    assert out.shape == (B, N, E)
    assert out.dtype == x.dtype

    # Exactness vs a reference with the same bf16 input rounding.
    ref_b = _reference_bf16(x, weight, bias, P)
    assert jnp.allclose(out, ref_b, atol=1e-3, rtol=1e-3)

    # Semantics vs the full-f32 conv reference (loose tol: bf16 inputs).
    ref_f = _reference_f32(x, weight, bias, P)
    assert jnp.allclose(out, ref_f, atol=2e-2, rtol=2e-2)

    # bf16-output fast path (halves writeback on v6e/v7x); loose tolerance.
    out_bf = jax.block_until_ready(
        patch_embed(x, weight, bias, P, out_dtype=jnp.bfloat16))
    assert out_bf.dtype == jnp.bfloat16
    assert jnp.allclose(out_bf.astype(jnp.float32), ref_f, atol=2e-2, rtol=2e-2)

    print("KERNEL_OK")
</pallas_src>

<mosaic_0001>
module attributes {stable_mosaic.version = 11 : i64} {
  func.func @_patch_embed_kernel(%arg0: i32, %arg1: memref<32x64xbf16, #tpu.memory_space<vmem>>, %arg2: memref<64x32xbf16, #tpu.memory_space<vmem>>, %arg3: memref<1x32xf32, #tpu.memory_space<vmem>>, %arg4: memref<32x32xf32, #tpu.memory_space<vmem>>) attributes {dimension_semantics = [#tpu.dimension_semantics<parallel>], iteration_bounds = array<i64: 1>, scalar_prefetch = 0 : i64, scratch_operands = 0 : i64, tpu.core_type = #tpu.core_type<tc>, window_params = [{transform_indices = @transform_0, window_bounds = array<i64: 32, 64>}, {pipeline_mode = #tpu.pipeline_mode<synchronous>, transform_indices = @transform_1, window_bounds = array<i64: 64, 32>}, {pipeline_mode = #tpu.pipeline_mode<synchronous>, transform_indices = @transform_2, window_bounds = array<i64: 1, 32>}, {transform_indices = @transform_3, window_bounds = array<i64: 32, 32>}]} {
    %c0 = arith.constant 0 : index
    %c0_0 = arith.constant 0 : index
    %0 = vector.load %arg1[%c0, %c0_0] : memref<32x64xbf16, #tpu.memory_space<vmem>>, vector<32x64xbf16>
    %c0_1 = arith.constant 0 : index
    %c0_2 = arith.constant 0 : index
    %1 = vector.load %arg2[%c0_1, %c0_2] : memref<64x32xbf16, #tpu.memory_space<vmem>>, vector<64x32xbf16>
    %cst = arith.constant dense<0.000000e+00> : vector<32x32xf32>
    %2 = tpu.matmul %0, %1, %cst {dimension_numbers = #tpu.dot_dimension_numbers<[1], [0], [0], [1], [0, 0, 1, 1], [], []>} : vector<32x64xbf16>, vector<64x32xbf16>, vector<32x32xf32> -> vector<32x32xf32>
    %c0_3 = arith.constant 0 : index
    %c0_4 = arith.constant 0 : index
    %3 = vector.load %arg3[%c0_3, %c0_4] : memref<1x32xf32, #tpu.memory_space<vmem>>, vector<1x32xf32>
    %4 = vector.broadcast %3 : vector<1x32xf32> to vector<32x32xf32>
    %5 = arith.addf %2, %4 : vector<32x32xf32>
    %c0_5 = arith.constant 0 : index
    %c0_6 = arith.constant 0 : index
    %6 = vector.load %arg4[%c0_5, %c0_6] : memref<32x32xf32, #tpu.memory_space<vmem>>, vector<32x32xf32>
    tpu.vector_store %arg4[%c0_5, %c0_6], %5 {strides = array<i32>} : memref<32x32xf32, #tpu.memory_space<vmem>>, vector<32x32xf32>,
    return
  }
  func.func @transform_0(%arg0: i32) -> (i32, i32) {
    %c0_i32 = arith.constant 0 : i32
    %c0_i32_0 = arith.constant 0 : i32
    return %arg0, %c0_i32 : i32, i32
  }
  func.func @transform_1(%arg0: i32) -> (i32, i32) {
    %c0_i32 = arith.constant 0 : i32
    %c0_i32_0 = arith.constant 0 : i32
    %c0_i32_1 = arith.constant 0 : i32
    return %c0_i32, %c0_i32_0 : i32, i32
  }
  func.func @transform_2(%arg0: i32) -> (i32, i32) {
    %c0_i32 = arith.constant 0 : i32
    %c0_i32_0 = arith.constant 0 : i32
    %c0_i32_1 = arith.constant 0 : i32
    return %c0_i32, %c0_i32_0 : i32, i32
  }
  func.func @transform_3(%arg0: i32) -> (i32, i32) {
    %c0_i32 = arith.constant 0 : i32
    %c0_i32_0 = arith.constant 0 : i32
    return %arg0, %c0_i32 : i32, i32
  }
}

</mosaic_0001>

<llo_original>
// kernel: tpu_custom_call.1
$region0: #{tpu_custom_call.1}
  #allocation0 [shape = 'u32[]', space=smem, size = 0x4, offset = 0x4, fixed_abs, tag = 'smem constant byte address 0x4 - core index']
  #allocation1 [shape = 'u32[144,128]{1,0:T(1,128)}', space=vmem, size = 0x12000, scoped, tag = 'internal scratch']
  %s0 = inlined_call_operand.vmem [shape: bf16[32,64], index: 0, kind: input, shape index: {}]
  %s1 = inlined_call_operand.vmem [shape: bf16[64,32], index: 1, kind: input, shape index: {}]
  %s2 = inlined_call_operand.vmem [shape: f32[1,32], index: 2, kind: input, shape index: {}]
  %s3 = inlined_call_operand.hbm [shape: f32[32,32], index: 3, kind: output, shape index: {}]
  %s4 = sld [smem:[#allocation0]]
  $region22: #{tpu_custom_call.1} parent=0
    _
  %s6 = ssub.s32 1, %s4
  %s7 = scalar_select 0, %s6, %s4
  $region1: #{tpu_custom_call.1} parent=0
    #allocation2 [shape = 'u8[16384]{0}', space=vmem, size = 0x4000, scoped, tag = 'output window, operand 0, single buffered']
    #allocation3 [shape = 's32[1]{0}', space=sflag, size = 0x4, scoped, tag = 'scoped memory for tpu_custom_call.1']
    %8 = vsyncpa [#allocation3], 0
    // Predicated region
    $region2: #{tpu_custom_call.1} parent=1 // pred_check
      _
    $region3: #{tpu_custom_call.1} parent=1 // pred_check_branch
      %10 = sbr.rel (0) target = $region5
    $region4: #{tpu_custom_call.1} parent=1 // pred_region
      _
    $region5: #{tpu_custom_call.1} parent=1 // pred_fallthru
      _
    // Predicated region
    $region6: #{tpu_custom_call.1} parent=1 // pred_check
      _
    $region7: #{tpu_custom_call.1} parent=1 // pred_check_branch
      %12 = sbr.rel (0) target = $region9
    $region8: #{tpu_custom_call.1} parent=1 // pred_region
      _
    $region9: #{tpu_custom_call.1} parent=1 // pred_fallthru
      _
    // Predicated region
    $region10: #{tpu_custom_call.1} parent=1 // pred_check
      _
    $region11: #{tpu_custom_call.1} parent=1 // pred_check_branch
      %14 = sbr.rel (0) target = $region13
    $region12: #{tpu_custom_call.1} parent=1 // pred_region
      _
    $region13: #{tpu_custom_call.1} parent=1 // pred_fallthru
      _
    %v16 = vld [vmem:[%s0] sm:$0xf]
    %v17 = vld [vmem:[%s0 + $0x4] sm:$0xf]
    %v18 = vld [vmem:[%s0 + $0x8] sm:$0xf]
    %v19 = vld [vmem:[%s0 + $0xc] sm:$0xf]
    %v20 = vld [vmem:[%s1] sm:$0xf]
    %v21 = vld [vmem:[%s1 + $0x4] sm:$0xf]
    %v22 = vld [vmem:[%s1 + $0x8] sm:$0xf]
    %v23 = vld [vmem:[%s1 + $0xc] sm:$0xf]
    %v24 = vld [vmem:[%s1 + $0x10] sm:$0xf]
    %v25 = vld [vmem:[%s1 + $0x14] sm:$0xf]
    %v26 = vld [vmem:[%s1 + $0x18] sm:$0xf]
    %v27 = vld [vmem:[%s1 + $0x1c] sm:$0xf]
    %v28 = vld [vmem:[%s2] sm:$0x1]
    %v30 = vlaneseq
    %v31 = vshrl.u32 %v30, 7
    %v32 = vsub.s32 0, %v31
    %v33 = vrot.slane %v28, %v32
    %v39 = vunpack.c.l.b16 %v16
    %v40 = vunpack.c.l.b16 %v17
    %v41 = vunpack.c.l.b16 %v18
    %v42 = vunpack.c.l.b16 %v19
    %v43 = vpack.c.b16 %v40, %v39
    %v44 = vpack.c.b16 %v42, %v41
    %v53 = vunpack.c.l.b16 %v20
    %v54 = vunpack.c.l.b16 %v21
    %v55 = vunpack.c.l.b16 %v22
    %v56 = vunpack.c.l.b16 %v23
    %v57 = vunpack.c.l.b16 %v24
    %v58 = vunpack.c.l.b16 %v25
    %v59 = vunpack.c.l.b16 %v26
    %v60 = vunpack.c.l.b16 %v27
    %v61 = vpack.c.b16 %v54, %v53
    %v62 = vpack.c.b16 %v56, %v55
    %v63 = vpack.c.b16 %v58, %v57
    %v64 = vpack.c.b16 %v60, %v59
    %vm69 = vcmask 523264
    %v71 = vsel %vm69, %v43, 0
    %v74 = vsel %vm69, %v44, 0
    %76 = vmatprep.subr.bf16.mxu0 0
    %77 = vmatpush1.bf16.msra.mxu0 %v61
    %78 = vmatprep.subr.bf16.mxu0 0
    %79 = vmatpush1.bf16.msra.mxu0 %v62
    %80 = vmatprep.subr.bf16.mxu0 0
    %81 = vmatpush1.bf16.msra.mxu0 %v63
    %82 = vmatprep.subr.bf16.mxu0 0
    %83 = vmatpush1.bf16.msra.mxu0 %v64
    %84 = vmatprep.subr.bf16.mxu0 0
    %85 = vmatpush1.bf16.msra.mxu0 0
    %86 = vmatprep.subr.bf16.mxu0 0
    %87 = vmatpush1.bf16.msra.mxu0 0
    %88 = vmatprep.subr.bf16.mxu0 0
    %89 = vmatpush1.bf16.msra.mxu0 0
    %90 = vmatprep.subr.bf16.mxu0 0
    %91 = vmatpush1.bf16.msra.mxu0 0
    %92 = vmatprep.subr.bf16.mxu0 0
    %93 = vmatpush1.bf16.msra.mxu0 0
    %94 = vmatprep.subr.bf16.mxu0 0
    %95 = vmatpush1.bf16.msra.mxu0 0
    %96 = vmatprep.subr.bf16.mxu0 0
    %97 = vmatpush1.bf16.msra.mxu0 0
    %98 = vmatprep.subr.bf16.mxu0 0
    %99 = vmatpush1.bf16.msra.mxu0 0
    %100 = vmatprep.subr.bf16.mxu0 0
    %101 = vmatpush1.bf16.msra.mxu0 0
    %102 = vmatprep.subr.bf16.mxu0 0
    %103 = vmatpush1.bf16.msra.mxu0 0
    %104 = vmatprep.subr.bf16.mxu0 0
    %105 = vmatpush1.bf16.msra.mxu0 0
    %106 = vmatprep.subr.bf16.mxu0 0
    %107 = vmatpush1.bf16.msra.mxu0 0
    %108 = vmatprep.mubr.bf16.mxu0 0
    %109 = vmatmul.mubr.bf16.gmra.mrb[0].mxu0 %v71
    %v110 = vpop.f32.mrb[0].mxu0
    %v111 = vadd.f32 %v33, %v110
    %v112 = vpop.f32.mrb[0].mxu0
    %v113 = vpop.f32.mrb[0].mxu0
    %v114 = vadd.f32 %v33, %v113
    %v115 = vpop.f32.mrb[0].mxu0
    %116 = vmatprep.mubr.bf16.mxu0 0
    %117 = vmatmul.mubr.bf16.gmra.mrb[0].mxu0 %v74
    %v118 = vpop.f32.mrb[0].mxu0
    %v119 = vadd.f32 %v33, %v118
    %v120 = vpop.f32.mrb[0].mxu0
    %v121 = vpop.f32.mrb[0].mxu0
    %v122 = vadd.f32 %v33, %v121
    %v123 = vpop.f32.mrb[0].mxu0
    %124 = vdwg.mxu0
    %vm125 = vcmask 261120
    %126 = vst.msk [vmem:[#allocation2] sm:$0xff] %vm125, %v111
    %127 = vst.msk [vmem:[#allocation2 + $0x8] sm:$0xff] %vm125, %v114
    %128 = vst.msk [vmem:[#allocation2 + $0x10] sm:$0xff] %vm125, %v119
    %129 = vst.msk [vmem:[#allocation2 + $0x18] sm:$0xff] %vm125, %v122
    // Predicated region
    $region14: #{tpu_custom_call.1} parent=1 // pred_check
      _
    $region15: #{tpu_custom_call.1} parent=1 // pred_check_branch
      %131 = sbr.rel (0) target = $region17
    $region16: #{tpu_custom_call.1} parent=1 // pred_region
      %s133 = ssub.s32 512, 512
      %134 = vsyncadd [#allocation3], %s133
      %s135 = sshll.u32 [#allocation2], 4
      %s136 = int_to_ptr.vmem [resolvable:$true] %s135
      %141 = dma.vmem_to_hbm [thread:$0]  %s136, 512, %s3, [#allocation3], 128, 128, 8
    $region17: #{tpu_custom_call.1} parent=1 // pred_fallthru
      _
    // Predicated region
    $region18: #{tpu_custom_call.1} parent=1 // pred_check
      _
    $region19: #{tpu_custom_call.1} parent=1 // pred_check_branch
      %143 = sbr.rel (0) target = $region21
    $region20: #{tpu_custom_call.1} parent=1 // pred_region
      %144 = dma.done [#allocation3], 512
    $region21: #{tpu_custom_call.1} parent=1 // pred_fallthru
      _
    %145 = vsyncpa [#allocation3], 1

</llo_original>
